<compile_context>
chip_gen: v5e
topology: v5e:2x2
jax: 0.10.0
libtpu: 0.0.40
codegen_flags: <defaults>
</compile_context>

<pallas_src>
import functools

import jax
import jax.numpy as jnp
from jax.experimental import pallas as pl
from jax.experimental.pallas import tpu as pltpu

_MIB = 1 << 20


def _vmem_budget_bytes():
    """Per-core VMEM the kernels may use (physical capacity minus headroom)."""
    try:
        cap = int(pltpu.get_tpu_info().vmem_capacity_bytes)
    except Exception:
        cap = 64 * _MIB  # conservative default = v7x per-core VMEM
    # ~96 MiB on v5e/v6e (128 MiB), ~48 MiB on v7x (64 MiB).
    return max(32 * _MIB, min(cap - 16 * _MIB, (cap * 3) // 4))


# ----------------------------------------------------------------------------
# Single-pass kernel: pool + gate + scale for a (Bt, C, HW) block.
# ----------------------------------------------------------------------------
def _se_fused_kernel(x_ref, w1t_ref, b1r_ref, w2t_ref, b2r_ref, o_ref, *, inv_hw):
    # Squeeze: f32 accumulation over the lane-dense spatial axis; dividing by
    # the true HW keeps the mean exact even for non-128-multiple HW.
    pooled = jnp.sum(x_ref[...].astype(jnp.float32), axis=-1) * inv_hw      # (Bt, C)

    # Excitation (tiny; fully hidden under the activation DMA).
    h = jnp.dot(pooled, w1t_ref[...], preferred_element_type=jnp.float32)
    h = jnp.maximum(h + b1r_ref[...], 0.0)                                  # (Bt, Cr)
    s = jnp.dot(h, w2t_ref[...], preferred_element_type=jnp.float32)
    s = jax.nn.sigmoid(s + b2r_ref[...])                                    # (Bt, C)

    # Scale: re-read the tile from VMEM (keeps vreg pressure flat) and store
    # in the activation dtype.
    gate = s.astype(o_ref.dtype)[:, :, None]                                # (Bt, C, 1)
    o_ref[...] = x_ref[...] * gate


# ----------------------------------------------------------------------------
# Two-stage fallback (sample too large for VMEM).
# Stage 1: HW-tiled pooled sum + gate (x read once). Stage 2: HW-tiled scale.
# ----------------------------------------------------------------------------
def _se_pool_gate_kernel(x_ref, w1t_ref, b1r_ref, w2t_ref, b2r_ref, s_ref,
                         *, inv_hw, hw_total, thw):
    hw_i = pl.program_id(1)

    @pl.when(hw_i == 0)
    def _init():
        s_ref[...] = jnp.zeros_like(s_ref)

    x = x_ref[...].astype(jnp.float32)                                      # (1, C, thw)
    # Mask the ragged edge block: data beyond hw_total is stale VMEM garbage.
    col = jax.lax.broadcasted_iota(jnp.int32, x.shape, 2) + hw_i * thw
    x = jnp.where(col < hw_total, x, 0.0)
    s_ref[...] += jnp.sum(x, axis=-1, keepdims=True)                        # (1, C, 1)

    @pl.when(hw_i == pl.num_programs(1) - 1)
    def _finalize():
        pooled = s_ref[...][:, :, 0] * inv_hw                               # (1, C)
        h = jnp.dot(pooled, w1t_ref[...], preferred_element_type=jnp.float32)
        h = jnp.maximum(h + b1r_ref[...], 0.0)                              # (1, Cr)
        g = jnp.dot(h, w2t_ref[...], preferred_element_type=jnp.float32)
        g = jax.nn.sigmoid(g + b2r_ref[...])                                # (1, C)
        s_ref[...] = g[:, :, None]                                          # gate, f32


def _se_scale_kernel(x_ref, s_ref, o_ref):
    o_ref[...] = x_ref[...] * s_ref[...].astype(o_ref.dtype)


# ----------------------------------------------------------------------------
# Wrapper
# ----------------------------------------------------------------------------
def se_module(x_nchw, w1, b1, w2, b2, *, force_two_stage=False):
    """SEModule forward.

    x_nchw : (B, C, H, W) float32 or bfloat16
    w1     : (Cr, C)  -- fc1 weight, PyTorch (out, in) layout
    b1     : (Cr,)
    w2     : (C, Cr)  -- fc2 weight, PyTorch (out, in) layout
    b2     : (C,)
    returns (B, C, H, W) in the dtype of x
    """
    B, C, H, W = x_nchw.shape
    HW = H * W
    Cr = w1.shape[0]

    # Lane-dense spatial axis; NO padding, NO extra HBM copies.
    x = x_nchw.reshape(B, C, HW)
    itemsize = x.dtype.itemsize

    # Gate params transposed to (in, out) so in-kernel matmuls are
    # (Bt, C) @ (C, Cr) and (Bt, Cr) @ (Cr, C); kept in f32 (tiny).
    w1t = jnp.asarray(w1, jnp.float32).T            # (C, Cr)
    w2t = jnp.asarray(w2, jnp.float32).T            # (Cr, C)
    b1r = jnp.asarray(b1, jnp.float32).reshape(1, Cr)
    b2r = jnp.asarray(b2, jnp.float32).reshape(1, C)

    budget = _vmem_budget_bytes()
    slack = 2 * _MIB
    param_bytes = (w1t.size + w2t.size + b1r.size + b2r.size) * 4
    # Constant-index params never need re-DMA; single-buffer them when large
    # (frees VMEM for activation tiles, esp. on v7x's 64 MiB VMEM).
    single_buffer_params = param_bytes >= 4 * _MIB
    param_vmem = param_bytes if single_buffer_params else 2 * param_bytes

    def _param_spec(shape):
        if single_buffer_params:
            return pl.BlockSpec(shape, lambda *_: (0, 0),
                                pipeline_mode=pl.Buffered(1))
        return pl.BlockSpec(shape, lambda *_: (0, 0))

    sample_bytes = C * HW * itemsize                # one (C, HW) tile of x
    fused_fits = (4 * sample_bytes + param_vmem + slack) <= budget
    inv_hw = 1.0 / float(HW)

    if fused_fits and not force_two_stage:
        # ---- Single pass: 1 read + 1 write of x (HBM-roofline minimum). ----
        # Pack Bt samples per step to amortize per-step overhead; keep >= 2
        # grid steps when B >= 2 so both v7x TensorCores get work.
        bt = 1
        for cand in range(1, B + 1):
            if B % cand:
                continue
            if B > 1 and B // cand < 2:
                continue
            if 4 * cand * sample_bytes + param_vmem + slack <= budget:
                bt = cand
        grid = (B // bt,)
        vmem_limit = int(min(budget, max(16 * _MIB,
                                         4 * bt * sample_bytes + param_vmem + slack)))
        kernel = functools.partial(_se_fused_kernel, inv_hw=inv_hw)
        out = pl.pallas_call(
            kernel,
            out_shape=jax.ShapeDtypeStruct((B, C, HW), x.dtype),
            grid=grid,
            in_specs=[
                pl.BlockSpec((bt, C, HW), lambda b: (b, 0, 0)),
                _param_spec((C, Cr)),
                _param_spec((1, Cr)),
                _param_spec((Cr, C)),
                _param_spec((1, C)),
            ],
            out_specs=pl.BlockSpec((bt, C, HW), lambda b: (b, 0, 0)),
            compiler_params=pltpu.CompilerParams(
                dimension_semantics=("parallel",),
                vmem_limit_bytes=vmem_limit,
            ),
        )(x, w1t, b1r, w2t, b2r)
        return out.reshape(B, C, H, W)

    # ---- Two-stage fallback: single sample does not fit (or forced). ----
    # Spatial tile: multiple of 128 lanes, sized to the VMEM budget.
    max_tile_bytes = max(128 * C * itemsize, (budget - param_vmem - slack) // 4)
    thw = max(128, (max_tile_bytes // (C * itemsize) // 128) * 128)
    if HW >= 128:
        thw = min(thw, (HW // 128) * 128)
    else:
        thw = HW
    nhw = pl.cdiv(HW, thw)

    # Stage 1: pooled sums + gate, x read once.  Output (B, C, 1) f32 gate.
    pool_kernel = functools.partial(_se_pool_gate_kernel,
                                    inv_hw=inv_hw, hw_total=HW, thw=thw)
    stage1_vmem = int(min(budget, max(16 * _MIB,
                                      2 * C * thw * itemsize + param_vmem
                                      + 8 * C * 4 + slack)))
    gate = pl.pallas_call(
        pool_kernel,
        out_shape=jax.ShapeDtypeStruct((B, C, 1), jnp.float32),
        grid=(B, nhw),
        in_specs=[
            pl.BlockSpec((1, C, thw), lambda b, h: (b, 0, h)),
            _param_spec((C, Cr)),
            _param_spec((1, Cr)),
            _param_spec((Cr, C)),
            _param_spec((1, C)),
        ],
        out_specs=pl.BlockSpec((1, C, 1), lambda b, h: (b, 0, 0)),
        compiler_params=pltpu.CompilerParams(
            dimension_semantics=("parallel", "arbitrary"),
            vmem_limit_bytes=stage1_vmem,
        ),
    )(x, w1t, b1r, w2t, b2r)

    # Stage 2: HW-tiled scale (both grid axes parallel -> uses both v7x cores).
    stage2_vmem = int(min(budget, max(16 * _MIB,
                                      4 * C * thw * itemsize + 8 * C * 4 + slack)))
    out = pl.pallas_call(
        _se_scale_kernel,
        out_shape=jax.ShapeDtypeStruct((B, C, HW), x.dtype),
        grid=(B, nhw),
        in_specs=[
            pl.BlockSpec((1, C, thw), lambda b, h: (b, 0, h)),
            pl.BlockSpec((1, C, 1), lambda b, h: (b, 0, 0)),
        ],
        out_specs=pl.BlockSpec((1, C, thw), lambda b, h: (b, 0, h)),
        compiler_params=pltpu.CompilerParams(
            dimension_semantics=("parallel", "parallel"),
            vmem_limit_bytes=stage2_vmem,
        ),
    )(x, gate)
    return out.reshape(B, C, H, W)


def reference_se(x, w1, b1, w2, b2):
    """Pure-JAX reference matching the PyTorch forward (PyTorch weight layout)."""
    x32 = x.astype(jnp.float32)
    pooled = jnp.mean(x32, axis=(2, 3))                   # (B, C)
    h = jnp.maximum(pooled @ w1.T + b1, 0.0)              # (B, Cr)
    s = jax.nn.sigmoid(h @ w2.T + b2)                     # (B, C)
    return x32 * s[:, :, None, None]


if __name__ == "__main__":
    B, C, H, W = 2, 4, 16, 16
    reduction = 2
    Cr = C // reduction

    key = jax.random.PRNGKey(0)
    kx, k1, k2, k3, k4 = jax.random.split(key, 5)

    x = jax.random.normal(kx, (B, C, H, W), dtype=jnp.float32)
    # PyTorch nn.Linear layout: weight (out, in), bias (out,)
    w1 = jax.random.normal(k1, (Cr, C), dtype=jnp.float32) * 0.1
    b1 = jax.random.normal(k2, (Cr,), dtype=jnp.float32) * 0.1
    w2 = jax.random.normal(k3, (C, Cr), dtype=jnp.float32) * 0.1
    b2 = jax.random.normal(k4, (C,), dtype=jnp.float32) * 0.1

    # 1) Single-pass path, 128-aligned spatial size.
    out = se_module(x, w1, b1, w2, b2)
    jax.block_until_ready(out)
    ref = reference_se(x, w1, b1, w2, b2)
    assert out.shape == (B, C, H, W)
    assert jnp.allclose(out, ref, atol=1e-5, rtol=1e-5), "mismatch (aligned)"

    # 2) Single-pass path, ragged HW (no host pad, no output slice).
    x2 = jax.random.normal(kx, (B, C, 10, 10), dtype=jnp.float32)
    out2 = se_module(x2, w1, b1, w2, b2)
    jax.block_until_ready(out2)
    assert jnp.allclose(out2, reference_se(x2, w1, b1, w2, b2),
                        atol=1e-5, rtol=1e-5), "mismatch (ragged HW)"

    # 3) bf16 activations end-to-end (gate math still accumulates in f32).
    xb = x.astype(jnp.bfloat16)
    outb = se_module(xb, w1, b1, w2, b2)
    jax.block_until_ready(outb)
    assert outb.dtype == jnp.bfloat16
    assert jnp.allclose(outb.astype(jnp.float32), reference_se(xb, w1, b1, w2, b2),
                        atol=3e-2, rtol=3e-2), "mismatch (bf16)"

    # 4) Two-stage fallback (forced): HW-tiled with a ragged edge block.
    C3, Cr3 = 8, 4
    x3 = jax.random.normal(kx, (2, C3, 20, 20), dtype=jnp.float32)
    w1f = jax.random.normal(k1, (Cr3, C3), dtype=jnp.float32) * 0.1
    b1f = jax.random.normal(k2, (Cr3,), dtype=jnp.float32) * 0.1
    w2f = jax.random.normal(k3, (C3, Cr3), dtype=jnp.float32) * 0.1
    b2f = jax.random.normal(k4, (C3,), dtype=jnp.float32) * 0.1
    out3 = se_module(x3, w1f, b1f, w2f, b2f, force_two_stage=True)
    jax.block_until_ready(out3)
    assert jnp.allclose(out3, reference_se(x3, w1f, b1f, w2f, b2f),
                        atol=1e-5, rtol=1e-5), "mismatch (two-stage fallback)"

    print("KERNEL_OK")
</pallas_src>

<mosaic_0001>
module attributes {stable_mosaic.version = 11 : i64} {
  func.func @_se_fused_kernel(%arg0: i32, %arg1: memref<1x4x256xf32, #tpu.memory_space<vmem>>, %arg2: memref<4x2xf32, #tpu.memory_space<vmem>>, %arg3: memref<1x2xf32, #tpu.memory_space<vmem>>, %arg4: memref<2x4xf32, #tpu.memory_space<vmem>>, %arg5: memref<1x4xf32, #tpu.memory_space<vmem>>, %arg6: memref<1x4x256xf32, #tpu.memory_space<vmem>>) attributes {dimension_semantics = [#tpu.dimension_semantics<parallel>], iteration_bounds = array<i64: 2>, scalar_prefetch = 0 : i64, scratch_operands = 0 : i64, tpu.core_type = #tpu.core_type<tc>, window_params = [{transform_indices = @transform_0, window_bounds = array<i64: 1, 4, 256>}, {pipeline_mode = #tpu.pipeline_mode<synchronous>, transform_indices = @transform_1, window_bounds = array<i64: 4, 2>}, {pipeline_mode = #tpu.pipeline_mode<synchronous>, transform_indices = @transform_2, window_bounds = array<i64: 1, 2>}, {pipeline_mode = #tpu.pipeline_mode<synchronous>, transform_indices = @transform_3, window_bounds = array<i64: 2, 4>}, {pipeline_mode = #tpu.pipeline_mode<synchronous>, transform_indices = @transform_4, window_bounds = array<i64: 1, 4>}, {transform_indices = @transform_5, window_bounds = array<i64: 1, 4, 256>}]} {
    %c0 = arith.constant 0 : index
    %c0_0 = arith.constant 0 : index
    %c0_1 = arith.constant 0 : index
    %0 = vector.load %arg1[%c0, %c0_0, %c0_1] : memref<1x4x256xf32, #tpu.memory_space<vmem>>, vector<1x4x256xf32>
    %cst = arith.constant dense<0.000000e+00> : vector<1x4xf32>
    %1 = vector.multi_reduction <add>, %0, %cst [2] : vector<1x4x256xf32> to vector<1x4xf32>
    %cst_2 = arith.constant 3.906250e-03 : f32
    %2 = vector.broadcast %cst_2 : f32 to vector<1x4xf32>
    %3 = arith.mulf %1, %2 : vector<1x4xf32>
    %c0_3 = arith.constant 0 : index
    %c0_4 = arith.constant 0 : index
    %4 = vector.load %arg2[%c0_3, %c0_4] : memref<4x2xf32, #tpu.memory_space<vmem>>, vector<4x2xf32>
    %cst_5 = arith.constant dense<0.000000e+00> : vector<1x2xf32>
    %5 = tpu.matmul %3, %4, %cst_5 {dimension_numbers = #tpu.dot_dimension_numbers<[1], [0], [0], [1], [0, 0, 1, 1], [], []>} : vector<1x4xf32>, vector<4x2xf32>, vector<1x2xf32> -> vector<1x2xf32>
    %c0_6 = arith.constant 0 : index
    %c0_7 = arith.constant 0 : index
    %6 = vector.load %arg3[%c0_6, %c0_7] : memref<1x2xf32, #tpu.memory_space<vmem>>, vector<1x2xf32>
    %7 = arith.addf %5, %6 : vector<1x2xf32>
    %cst_8 = arith.constant 0.000000e+00 : f32
    %8 = vector.broadcast %cst_8 : f32 to vector<1x2xf32>
    %9 = arith.maximumf %7, %8 : vector<1x2xf32>
    %c0_9 = arith.constant 0 : index
    %c0_10 = arith.constant 0 : index
    %10 = vector.load %arg4[%c0_9, %c0_10] : memref<2x4xf32, #tpu.memory_space<vmem>>, vector<2x4xf32>
    %cst_11 = arith.constant dense<0.000000e+00> : vector<1x4xf32>
    %11 = tpu.matmul %9, %10, %cst_11 {dimension_numbers = #tpu.dot_dimension_numbers<[1], [0], [0], [1], [0, 0, 1, 1], [], []>} : vector<1x2xf32>, vector<2x4xf32>, vector<1x4xf32> -> vector<1x4xf32>
    %c0_12 = arith.constant 0 : index
    %c0_13 = arith.constant 0 : index
    %12 = vector.load %arg5[%c0_12, %c0_13] : memref<1x4xf32, #tpu.memory_space<vmem>>, vector<1x4xf32>
    %13 = arith.addf %11, %12 : vector<1x4xf32>
    %14 = arith.negf %13 : vector<1x4xf32>
    %15 = math.exp %14 : vector<1x4xf32>
    %cst_14 = arith.constant 1.000000e+00 : f32
    %16 = vector.broadcast %cst_14 : f32 to vector<1x4xf32>
    %17 = arith.addf %16, %15 : vector<1x4xf32>
    %18 = arith.divf %16, %17 : vector<1x4xf32>
    %19 = vector.shape_cast %18 : vector<1x4xf32> to vector<1x4x1xf32>
    %c0_15 = arith.constant 0 : index
    %c0_16 = arith.constant 0 : index
    %c0_17 = arith.constant 0 : index
    %20 = vector.load %arg1[%c0_15, %c0_16, %c0_17] : memref<1x4x256xf32, #tpu.memory_space<vmem>>, vector<1x4x256xf32>
    %21 = vector.broadcast %19 : vector<1x4x1xf32> to vector<1x4x256xf32>
    %22 = arith.mulf %20, %21 : vector<1x4x256xf32>
    %c0_18 = arith.constant 0 : index
    %c0_19 = arith.constant 0 : index
    %c0_20 = arith.constant 0 : index
    %23 = vector.load %arg6[%c0_18, %c0_19, %c0_20] : memref<1x4x256xf32, #tpu.memory_space<vmem>>, vector<1x4x256xf32>
    tpu.vector_store %arg6[%c0_18, %c0_19, %c0_20], %22 {strides = array<i32>} : memref<1x4x256xf32, #tpu.memory_space<vmem>>, vector<1x4x256xf32>,
    return
  }
  func.func @transform_0(%arg0: i32) -> (i32, i32, i32) {
    %c0_i32 = arith.constant 0 : i32
    %c0_i32_0 = arith.constant 0 : i32
    %c0_i32_1 = arith.constant 0 : i32
    return %arg0, %c0_i32, %c0_i32_0 : i32, i32, i32
  }
  func.func @transform_1(%arg0: i32) -> (i32, i32) {
    %c0_i32 = arith.constant 0 : i32
    %c0_i32_0 = arith.constant 0 : i32
    %c0_i32_1 = arith.constant 0 : i32
    return %c0_i32, %c0_i32_0 : i32, i32
  }
  func.func @transform_2(%arg0: i32) -> (i32, i32) {
    %c0_i32 = arith.constant 0 : i32
    %c0_i32_0 = arith.constant 0 : i32
    %c0_i32_1 = arith.constant 0 : i32
    return %c0_i32, %c0_i32_0 : i32, i32
  }
  func.func @transform_3(%arg0: i32) -> (i32, i32) {
    %c0_i32 = arith.constant 0 : i32
    %c0_i32_0 = arith.constant 0 : i32
    %c0_i32_1 = arith.constant 0 : i32
    return %c0_i32, %c0_i32_0 : i32, i32
  }
  func.func @transform_4(%arg0: i32) -> (i32, i32) {
    %c0_i32 = arith.constant 0 : i32
    %c0_i32_0 = arith.constant 0 : i32
    %c0_i32_1 = arith.constant 0 : i32
    return %c0_i32, %c0_i32_0 : i32, i32
  }
  func.func @transform_5(%arg0: i32) -> (i32, i32, i32) {
    %c0_i32 = arith.constant 0 : i32
    %c0_i32_0 = arith.constant 0 : i32
    %c0_i32_1 = arith.constant 0 : i32
    return %arg0, %c0_i32, %c0_i32_0 : i32, i32, i32
  }
}

</mosaic_0001>

<llo_original>
// kernel: tpu_custom_call.1
$region0: #{tpu_custom_call.1}
  #allocation0 [shape = 'u32[]', space=smem, size = 0x4, offset = 0x4, fixed_abs, tag = 'smem constant byte address 0x4 - core index']
  #allocation1 [shape = 'u32[72,128]{1,0:T(1,128)}', space=vmem, size = 0x9000, scoped, tag = 'internal scratch']
  %s0 = inlined_call_operand.hbm [shape: f32[2,4,256], index: 0, kind: input, shape index: {}]
  %s1 = inlined_call_operand.vmem [shape: f32[4,2], index: 1, kind: input, shape index: {}]
  %s2 = inlined_call_operand.vmem [shape: f32[1,2], index: 2, kind: input, shape index: {}]
  %s3 = inlined_call_operand.vmem [shape: f32[2,4], index: 3, kind: input, shape index: {}]
  %s4 = inlined_call_operand.vmem [shape: f32[1,4], index: 4, kind: input, shape index: {}]
  %s5 = inlined_call_operand.hbm [shape: f32[2,4,256], index: 5, kind: output, shape index: {}]
  %s6 = sld [smem:[#allocation0]]
  $region57: #{tpu_custom_call.1} parent=0
    _
  %s8 = ssub.s32 1, %s6
  %s9 = scalar_select 0, %s8, %s6
  $region1: #{tpu_custom_call.1} parent=0
    #allocation2 [shape = 'u8[8192]{0}', space=vmem, size = 0x2000, scoped, tag = 'input window, operand 0']
    #allocation3 [shape = 's32[2]{0}', space=sflag, size = 0x8, scoped, tag = 'scoped memory for tpu_custom_call.1']
    #allocation4 [shape = 's32[2]{0}', space=sflag, size = 0x8, scoped, tag = 'scoped memory for tpu_custom_call.1']
    #allocation5 [shape = 'u8[8192]{0}', space=vmem, size = 0x2000, scoped, tag = 'output window, operand 0']
    %10 = vsyncpa [#allocation3], 0
    %s11 = scalar_lea.sflag [#allocation3], 1
    %12 = vsyncpa %s11, 0
    %13 = vsyncpa [#allocation4], 0
    %s14 = scalar_lea.sflag [#allocation4], 1
    %15 = vsyncpa %s14, 0
    loop: start=0, step=1, limit=4
    $region2: #{tpu_custom_call.1} parent=1 // loop_pre_header
      _
    $region3: #{tpu_custom_call.1} parent=1 // loop_header
      %s17 = sphi 0, %s21
      %p18 = scmp.ge.s32.totalorder %s17, 4
      %s27 = sphi 0, %s29
      %s30 = sphi 0, %s27
      %s31 = sphi 0, %s30
      %s47 = sphi 0, %s31
      %s51 = sphi 0, %s51
      %s53 = sphi 0, %s51
      %s54 = sphi 0, %s53
      %s68 = sphi 0, %s54
      %s72 = sphi 0, %s72
      %s74 = sphi 0, %s72
      %s75 = sphi 0, %s74
      %s89 = sphi 0, %s75
      %s93 = sphi 0, %s93
      %s95 = sphi 0, %s93
      %s96 = sphi 0, %s95
      %s110 = sphi 0, %s96
      %s114 = sphi 0, %s114
      %s116 = sphi 0, %s114
      %s117 = sphi 0, %s116
      %s131 = sphi 0, %s117
      %s137 = sphi 0, %s139
      %s140 = sphi 0, %s137
      %s141 = sphi 0, %s140
      %s157 = sphi 0, %s141
    $region4: #{tpu_custom_call.1} parent=1 // loop_header_branch
      %20 = sbr.rel (%p18) target = $region8
    $region5: #{tpu_custom_call.1} parent=1 // loop_body
      %s22 = ssub.s32 %s17, 1
      %s23 = ssub.s32 %s17, 2
      %s24 = sadd.s32 %s17, 1
      %s25 = ssub.s32 %s17, %s24
      %p26 = scmp.eq.s32.totalorder %s25, 0
      %s28 = sadd.s32 %s27, 1
      %s29 = scalar_select %p26, %s27, %s28
      %p32 = pneg %p26
      %p33 = scmp.eq.s32.totalorder %s17, 1
      %p34 = por %p32, %p33
      %p35 = scmp.ne.s32.totalorder %s27, %s30
      %p36 = scmp.eq.s32.totalorder %s17, 0
      %p37 = por %p35, %p36
      %p38 = scmp.ne.s32.totalorder %s27, %s30
      %p39 = scmp.eq.s32.totalorder %s22, 1
      %p40 = por %p38, %p39
      %p41 = scmp.ne.s32.totalorder %s30, %s31
      %p42 = scmp.eq.s32.totalorder %s22, 0
      %p43 = por %p41, %p42
      %p44 = scmp.ne.s32.totalorder %s30, %s31
      %p45 = scmp.eq.s32.totalorder %s23, 1
      %p46 = por %p44, %p45
      %p48 = scmp.ne.s32.totalorder %s31, %s47
      %p49 = scmp.eq.s32.totalorder %s23, 0
      %p50 = por %p48, %p49
      %s52 = sadd.s32 %s51, 1
      %p55 = scmp.eq.s32.totalorder %s17, 1
      %p56 = scmp.ne.s32.totalorder %s51, %s53
      %p57 = scmp.eq.s32.totalorder %s17, 0
      %p58 = por %p56, %p57
      %p59 = scmp.ne.s32.totalorder %s51, %s53
      %p60 = scmp.eq.s32.totalorder %s22, 1
      %p61 = por %p59, %p60
      %p62 = scmp.ne.s32.totalorder %s53, %s54
      %p63 = scmp.eq.s32.totalorder %s22, 0
      %p64 = por %p62, %p63
      %p65 = scmp.ne.s32.totalorder %s53, %s54
      %p66 = scmp.eq.s32.totalorder %s23, 1
      %p67 = por %p65, %p66
      %p69 = scmp.ne.s32.totalorder %s54, %s68
      %p70 = scmp.eq.s32.totalorder %s23, 0
      %p71 = por %p69, %p70
      %s73 = sadd.s32 %s72, 1
      %p76 = scmp.eq.s32.totalorder %s17, 1
      %p77 = scmp.ne.s32.totalorder %s72, %s74
      %p78 = scmp.eq.s32.totalorder %s17, 0
      %p79 = por %p77, %p78
      %p80 = scmp.ne.s32.totalorder %s72, %s74
      %p81 = scmp.eq.s32.totalorder %s22, 1
      %p82 = por %p80, %p81
      %p83 = scmp.ne.s32.totalorder %s74, %s75
      %p84 = scmp.eq.s32.totalorder %s22, 0
      %p85 = por %p83, %p84
      %p86 = scmp.ne.s32.totalorder %s74, %s75
      %p87 = scmp.eq.s32.totalorder %s23, 1
      %p88 = por %p86, %p87
      %p90 = scmp.ne.s32.totalorder %s75, %s89
      %p91 = scmp.eq.s32.totalorder %s23, 0
      %p92 = por %p90, %p91
      %s94 = sadd.s32 %s93, 1
      %p97 = scmp.eq.s32.totalorder %s17, 1
      %p98 = scmp.ne.s32.totalorder %s93, %s95
      %p99 = scmp.eq.s32.totalorder %s17, 0
      %p100 = por %p98, %p99
      %p101 = scmp.ne.s32.totalorder %s93, %s95
      %p102 = scmp.eq.s32.totalorder %s22, 1
      %p103 = por %p101, %p102
      %p104 = scmp.ne.s32.totalorder %s95, %s96
      %p105 = scmp.eq.s32.totalorder %s22, 0
      %p106 = por %p104, %p105
      %p107 = scmp.ne.s32.totalorder %s95, %s96
      %p108 = scmp.eq.s32.totalorder %s23, 1
      %p109 = por %p107, %p108
      %p111 = scmp.ne.s32.totalorder %s96, %s110
      %p112 = scmp.eq.s32.totalorder %s23, 0
      %p113 = por %p111, %p112
      %s115 = sadd.s32 %s114, 1
      %p118 = scmp.eq.s32.totalorder %s17, 1
      %p119 = scmp.ne.s32.totalorder %s114, %s116
      %p120 = scmp.eq.s32.totalorder %s17, 0
      %p121 = por %p119, %p120
      %p122 = scmp.ne.s32.totalorder %s114, %s116
      %p123 = scmp.eq.s32.totalorder %s22, 1
      %p124 = por %p122, %p123
      %p125 = scmp.ne.s32.totalorder %s116, %s117
      %p126 = scmp.eq.s32.totalorder %s22, 0
      %p127 = por %p125, %p126
      %p128 = scmp.ne.s32.totalorder %s116, %s117
      %p129 = scmp.eq.s32.totalorder %s23, 1
      %p130 = por %p128, %p129
      %p132 = scmp.ne.s32.totalorder %s117, %s131
      %p133 = scmp.eq.s32.totalorder %s23, 0
      %p134 = por %p132, %p133
      %s135 = ssub.s32 %s17, %s24
      %p136 = scmp.eq.s32.totalorder %s135, 0
      %s138 = sadd.s32 %s137, 1
      %s139 = scalar_select %p136, %s137, %s138
      %p142 = pneg %p136
      %p143 = scmp.eq.s32.totalorder %s17, 1
      %p144 = por %p142, %p143
      %p145 = scmp.ne.s32.totalorder %s137, %s140
      %p146 = scmp.eq.s32.totalorder %s17, 0
      %p147 = por %p145, %p146
      %p148 = scmp.ne.s32.totalorder %s137, %s140
      %p149 = scmp.eq.s32.totalorder %s22, 1
      %p150 = por %p148, %p149
      %p151 = scmp.ne.s32.totalorder %s140, %s141
      %p152 = scmp.eq.s32.totalorder %s22, 0
      %p153 = por %p151, %p152
      %p154 = scmp.ne.s32.totalorder %s140, %s141
      %p155 = scmp.eq.s32.totalorder %s23, 1
      %p156 = por %p154, %p155
      %p158 = scmp.ne.s32.totalorder %s141, %s157
      %p159 = scmp.eq.s32.totalorder %s23, 0
      %p160 = por %p158, %p159
      %p161 = scmp.le.s32.totalorder 1, %s17
      %p162 = scmp.lt.s32.totalorder %s17, 3
      %p163 = pnand %p161, %p162
      %p164 = pneg %p163
      // Predicated region
      $region9: #{tpu_custom_call.1} parent=5 // pred_check
        _
      $region10: #{tpu_custom_call.1} parent=5 // pred_check_branch
        %166 = sbr.rel (%p163) target = $region12
      $region11: #{tpu_custom_call.1} parent=5 // pred_region
        %s167 = ssub.s32 %s17, 1
        // Predicated region
        $region13: #{tpu_custom_call.1} parent=11 // pred_check
          %p168 = pneg %p64
        $region14: #{tpu_custom_call.1} parent=11 // pred_check_branch
          %170 = sbr.rel (%p168) target = $region16
        $region15: #{tpu_custom_call.1} parent=11 // pred_region
          _
        $region16: #{tpu_custom_call.1} parent=11 // pred_fallthru
          _
        // Predicated region
        $region17: #{tpu_custom_call.1} parent=11 // pred_check
          %p171 = pneg %p85
        $region18: #{tpu_custom_call.1} parent=11 // pred_check_branch
          %173 = sbr.rel (%p171) target = $region20
        $region19: #{tpu_custom_call.1} parent=11 // pred_region
          _
        $region20: #{tpu_custom_call.1} parent=11 // pred_fallthru
          _
        // Predicated region
        $region21: #{tpu_custom_call.1} parent=11 // pred_check
          %p174 = pneg %p106
        $region22: #{tpu_custom_call.1} parent=11 // pred_check_branch
          %176 = sbr.rel (%p174) target = $region24
        $region23: #{tpu_custom_call.1} parent=11 // pred_region
          _
        $region24: #{tpu_custom_call.1} parent=11 // pred_fallthru
          _
        // Predicated region
        $region25: #{tpu_custom_call.1} parent=11 // pred_check
          %p177 = pneg %p127
        $region26: #{tpu_custom_call.1} parent=11 // pred_check_branch
          %179 = sbr.rel (%p177) target = $region28
        $region27: #{tpu_custom_call.1} parent=11 // pred_region
          _
        $region28: #{tpu_custom_call.1} parent=11 // pred_fallthru
          _
      $region12: #{tpu_custom_call.1} parent=5 // pred_fallthru
        _
      %p180 = scmp.lt.s32.totalorder %s17, 2
      // Predicated region
      $region29: #{tpu_custom_call.1} parent=5 // pred_check
        %p181 = pneg %p180
      $region30: #{tpu_custom_call.1} parent=5 // pred_check_branch
        %183 = sbr.rel (%p181) target = $region32
      $region31: #{tpu_custom_call.1} parent=5 // pred_region
        // Predicated region
        $region33: #{tpu_custom_call.1} parent=31 // pred_check
          %p184 = pneg %p37
        $region34: #{tpu_custom_call.1} parent=31 // pred_check_branch
          %186 = sbr.rel (%p184) target = $region36
        $region35: #{tpu_custom_call.1} parent=31 // pred_region
          %s187 = sand.u32 %s27, 1
          %s188 = scalar_lea.sflag [#allocation3], %s187
          %s189 = sand.u32 %s27, 1
          %s190 = smul.addr %s189, 8
          %s191 = scalar_lea.vmem [#allocation2], %s190
          %193 = vsyncadd %s188, 0
          %s194 = smul.addr %s17, 2
          %s195 = smul.addr %s194, 4
          %s196 = scalar_lea.hbm %s0, %s195
          %s198 = sshll.u32 %s196, 4
          %s199 = int_to_ptr.hbm [resolvable:$true] %s198
          %s200 = sshll.u32 %s191, 4
          %s201 = int_to_ptr.vmem [resolvable:$true] %s200
          %203 = dma.hbm_to_vmem [thread:$0]  %s199, 128, %s201, %s188
        $region36: #{tpu_custom_call.1} parent=31 // pred_fallthru
          _
      $region32: #{tpu_custom_call.1} parent=5 // pred_fallthru
        _
      %p204 = scmp.le.s32.totalorder 1, %s17
      %p205 = scmp.lt.s32.totalorder %s17, 3
      %p206 = pnand %p204, %p205
      %p207 = pneg %p206
      // Predicated region
      $region37: #{tpu_custom_call.1} parent=5 // pred_check
        _
      $region38: #{tpu_custom_call.1} parent=5 // pred_check_branch
        %209 = sbr.rel (%p206) target = $region40
      $region39: #{tpu_custom_call.1} parent=5 // pred_region
        %s210 = ssub.s32 %s17, 1
        %s211 = sand.u32 %s30, 1
        %s212 = scalar_lea.sflag [#allocation3], %s211
        %s213 = sand.u32 %s30, 1
        %s214 = smul.addr %s213, 8
        %s215 = scalar_lea.vmem [#allocation2], %s214
        // Predicated region
        $region41: #{tpu_custom_call.1} parent=39 // pred_check
          %p216 = pneg %p43
        $region42: #{tpu_custom_call.1} parent=39 // pred_check_branch
          %218 = sbr.rel (%p216) target = $region44
        $region43: #{tpu_custom_call.1} parent=39 // pred_region
          %220 = dma.done %s212, 128
        $region44: #{tpu_custom_call.1} parent=39 // pred_fallthru
          _
        %s221 = sand.u32 %s30, 1
        %s222 = scalar_lea.sflag [#allocation3], %s221
        %s223 = sand.u32 %s30, 1
        %s224 = smul.addr %s223, 8
        %s225 = scalar_lea.vmem [#allocation2], %s224
        %p226 = pneg %p43
        %p227 = pneg %p40
        %p228 = pneg %p64
        %p229 = pneg %p61
        %p230 = pneg %p85
        %p231 = pneg %p82
        %p232 = pneg %p106
        %p233 = pneg %p103
        %p234 = pneg %p127
        %p235 = pneg %p124
        %p236 = pneg %p153
        %p237 = pneg %p150
        %s238 = sand.u32 %s140, 1
        %s239 = scalar_lea.sflag [#allocation4], %s238
        %s240 = sand.u32 %s140, 1
        %s241 = smul.addr %s240, 8
        %s242 = scalar_lea.vmem [#allocation5], %s241
        %v243 = vld [vmem:[%s215] sm:$0xff]
        %245 = vst [vmem:[#allocation1] ss:$2 sm:$0xff] %v243
        %v246 = vld.sshfl [vmem:[#allocation1] sm:$0xff pattern:$0x75316420]
        %v247 = vld.sshfl [vmem:[#allocation1 + $0x8] sm:$0xff pattern:$0x75316420]
        %vm250 = vcmask 1043456
        %v251 = vsel %vm250, %v246, 0.0
        %v252 = vsel %vm250, %v247, 0.0
        %v253 = vadd.f32 %v251, %v252
        %254 = vadd.xlane.f32.xlu0 %v253
        %v255 = vpop.xlane.xlu0 %254
        %v256 = vmul.f32 %v255, 0.00390625
        %v257 = vld [vmem:[%s1] sm:$0xf]
        %v258 = vld [vmem:[%s2] sm:$0x1]
        %v260 = vlaneseq
        %v261 = vand.u32 %v260, 127
        %v262 = vperm.slane %v256, %v261
        %vm263 = vcmask 31744
        %v264 = vsel %vm263, %v262, 0
        %v267 = vsel %vm250, %v257, 0
        %269 = vmatpush.msra.mxu0 0.0
        %270 = vmatpush.msra.mxu0 0.0
        %271 = vmatpush.msra.mxu0 0.0
        %272 = vmatpush.msra.mxu0 0.0
        %273 = vmatpush.msra.mxu0 0.0
        %274 = vmatpush.msra.mxu0 0.0
        %275 = vmatpush.msra.mxu0 0.0
        %276 = vmatpush.msra.mxu0 0.0
        %277 = vmatpush.msra.mxu0 0.0
        %278 = vmatpush.msra.mxu0 0.0
        %279 = vmatpush.msra.mxu0 0.0
        %280 = vmatpush.msra.mxu0 0.0
        %281 = vmatpush.msra.mxu0 0.0
        %282 = vmatpush.msra.mxu0 0.0
        %283 = vmatpush.msra.mxu0 0.0
        %284 = vmatpush.msra.mxu0 %v267
        %285 = vmatmul.f32.gmra.mxu0 %v264
        %v286 = vpop.f32.mrf.mxu0
        %v287 = vadd.f32 %v258, %v286
        %288 = vdwg.mxu0
        %v289 = vmax.f32 %v287, 0.0
        %v290 = vld [vmem:[%s3] sm:$0x3]
        %v291 = vld [vmem:[%s4] sm:$0x1]
        %vm292 = vcmask 15360
        %v294 = vsel %vm292, %v289, 0
        %vm296 = vcmask 1041408
        %v298 = vsel %vm296, %v290, 0
        %300 = vmatpush.msra.mxu0 0.0
        %301 = vmatpush.msra.mxu0 0.0
        %302 = vmatpush.msra.mxu0 0.0
        %303 = vmatpush.msra.mxu0 0.0
        %304 = vmatpush.msra.mxu0 0.0
        %305 = vmatpush.msra.mxu0 0.0
        %306 = vmatpush.msra.mxu0 0.0
        %307 = vmatpush.msra.mxu0 0.0
        %308 = vmatpush.msra.mxu0 0.0
        %309 = vmatpush.msra.mxu0 0.0
        %310 = vmatpush.msra.mxu0 0.0
        %311 = vmatpush.msra.mxu0 0.0
        %312 = vmatpush.msra.mxu0 0.0
        %313 = vmatpush.msra.mxu0 0.0
        %314 = vmatpush.msra.mxu0 0.0
        %315 = vmatpush.msra.mxu0 %v298
        %316 = vmatmul.f32.gmra.mxu0 %v294
        %v317 = vpop.f32.mrf.mxu0
        %v318 = vadd.f32 %v291, %v317
        %319 = vdwg.mxu0
        %v320 = vxor.u32 %v318, 2147483648
        %v321 = vmul.f32 %v320, 1.442695
        %v322 = vpow.pop %v321
        %v323 = vadd.f32 %v322, 1.0
        %v324 = vrcp.pop %v323
        %v325 = vmul.f32 %v323, %v324
        %v326 = vsub.f32 1.0, %v325
        %v327 = vmul.f32 %v324, %v326
        %v328 = vadd.f32 %v324, %v327
        %vm329 = vweird.f32 %v323
        %vm330 = vweird.f32 %v324
        %vm331 = vmor %vm329, %vm330
        %v332 = vsel %vm331, %v324, %v328
        %v333 = vand.u32 2147483647, %v323
        %vm334 = vcmp.eq.f32.partialorder %v333, 8.507059e+37
        %v335 = vand.u32 %v323, 2147483648
        %v336 = vor.u32 1.1754944e-38, %v335
        %v337 = vsel %vm334, %v336, %v332
        %v338 = vmul.f32 1.0, %v337
        %v339 = vperm.slane %v338, 0
        %v340 = vlaneseq
        %v341 = vshrl.u32 %v340, 7
        %343 = vset.pattern.permute.xlu0 %v341
        %344 = vperm.xlu0 %343, %v339
        %v345 = vpop.permute.xlu0 %344
        %v348 = vunpack.c.l.s4 839922192
        %v349 = vunpack.c.0.s8 %v348
        %v350 = vperm.slane %v345, %v349
        %v352 = vmul.f32 %v243, %v350
        %353 = vst [vmem:[%s242] sm:$0xff] %v352
        %s354 = sand.u32 %s140, 1
        %s355 = scalar_lea.sflag [#allocation4], %s354
        %s356 = sand.u32 %s140, 1
        %s357 = smul.addr %s356, 8
        %s358 = scalar_lea.vmem [#allocation5], %s357
        // Predicated region
        $region45: #{tpu_custom_call.1} parent=39 // pred_check
          %p359 = pneg %p150
        $region46: #{tpu_custom_call.1} parent=39 // pred_check_branch
          %361 = sbr.rel (%p359) target = $region48
        $region47: #{tpu_custom_call.1} parent=39 // pred_region
          %363 = vsyncadd %s355, 0
          %s364 = smul.addr %s22, 2
          %s365 = smul.addr %s364, 4
          %s366 = scalar_lea.hbm %s5, %s365
          %s368 = sshll.u32 %s358, 4
          %s369 = int_to_ptr.vmem [resolvable:$true] %s368
          %s370 = sshll.u32 %s366, 4
          %s371 = int_to_ptr.hbm [resolvable:$true] %s370
          %373 = dma.vmem_to_hbm [thread:$0]  %s369, 128, %s371, %s355
        $region48: #{tpu_custom_call.1} parent=39 // pred_fallthru
          _
      $region40: #{tpu_custom_call.1} parent=5 // pred_fallthru
        _
      %p374 = scmp.le.s32.totalorder 2, %s17
      // Predicated region
      $region49: #{tpu_custom_call.1} parent=5 // pred_check
        %p375 = pneg %p374
      $region50: #{tpu_custom_call.1} parent=5 // pred_check_branch
        %377 = sbr.rel (%p375) target = $region52
      $region51: #{tpu_custom_call.1} parent=5 // pred_region
        %s378 = ssub.s32 %s17, 2
        // Predicated region
        $region53: #{tpu_custom_call.1} parent=51 // pred_check
          %p379 = pneg %p156
        $region54: #{tpu_custom_call.1} parent=51 // pred_check_branch
          %381 = sbr.rel (%p379) target = $region56
        $region55: #{tpu_custom_call.1} parent=51 // pred_region
          %s382 = sand.u32 %s141, 1
          %s383 = scalar_lea.sflag [#allocation4], %s382
          %s384 = sand.u32 %s141, 1
          %s385 = smul.addr %s384, 8
          %s386 = scalar_lea.vmem [#allocation5], %s385
          %388 = dma.done %s383, 128
        $region56: #{tpu_custom_call.1} parent=51 // pred_fallthru
          _
      $region52: #{tpu_custom_call.1} parent=5 // pred_fallthru
        _
    $region6: #{tpu_custom_call.1} parent=1 // loop_footer
      %s21 = sadd.s32 1, %s17
    $region7: #{tpu_custom_call.1} parent=1 // loop_footer_branch
      %16 = sbr.rel target = $region3
    $region8: #{tpu_custom_call.1} parent=1 // loop_exit
      _
    %389 = vsyncpa [#allocation3], 1
    %s390 = scalar_lea.sflag [#allocation3], 1
    %391 = vsyncpa %s390, 1
    %392 = vsyncpa [#allocation4], 1
    %s393 = scalar_lea.sflag [#allocation4], 1
    %394 = vsyncpa %s393, 1

</llo_original>
